<compile_context>
chip_gen: v7x
topology: tpu7x:2x2x1
jax: 0.10.0
libtpu: 0.0.40
codegen_flags: <defaults>
</compile_context>

<pallas_src>
import functools

import jax
import jax.numpy as jnp
from jax.experimental import pallas as pl
from jax.experimental.pallas import tpu as pltpu


def _round_up(x, m):
    return ((x + m - 1) // m) * m


def _attention_kernel(x_ref, w_ref, wq_ref, o_ref, *, split, input_dim):
    # x_ref: (TN, split*D)   w_ref: (D, O)   wq_ref: (D, O)   o_ref: (TN, O)
    w = w_ref[...]            # packed per-head projection (resident weight)
    wq = wq_ref[...]          # projection fused with head query (resident)

    xh = []
    logit = []
    for s in range(split):    # split is tiny (1-2): static loop
        x_s = x_ref[:, pl.ds(s * input_dim, input_dim)]            # (TN, D)
        # fused projection for all heads: (TN, D) @ (D, H*P), f32 acc
        xh.append(jnp.dot(x_s, w, preferred_element_type=jnp.float32))
        # per-head logits (replicated per_dim times along lanes), computed as
        # an INDEPENDENT matmul on x_s (Wq precomputed wrapper-side).
        l_s = jnp.dot(x_s, wq, preferred_element_type=jnp.float32)
        # LeakyReLU(0.2)
        logit.append(jnp.where(l_s > 0, l_s, 0.2 * l_s))

    # softmax over the split axis == element-wise across the `split` arrays
    m = logit[0]
    for s in range(1, split):
        m = jnp.maximum(m, logit[s])
    es = [jnp.exp(l - m) for l in logit]
    denom = es[0]
    for s in range(1, split):
        denom = denom + es[s]
    inv = 1.0 / denom          # exact divide; free in this mem-bound kernel

    # weighted sum over split; columns are already in concat-over-heads order
    acc = xh[0] * (es[0] * inv)
    for s in range(1, split):
        acc = acc + xh[s] * (es[s] * inv)
    o_ref[...] = acc.astype(o_ref.dtype)


def pack_params(w_stacked, q_stacked):
    """w_stacked: (H, D, P), q_stacked: (H, P) -> (D, H*P) and (D, H*P).

    Returns (w_packed, wq_packed):
      w_packed  : projection with columns ordered like torch.cat over heads.
      wq_packed : w_packed @ q_exp, where q_exp replicates each head's scalar
                  logit across that head's per_dim output lanes.
    """
    num_heads, input_dim, per_dim = w_stacked.shape
    # the PyTorch module only concatenates cleanly when this holds
    assert num_heads * per_dim == input_dim, (
        "pack_params requires input_dim % num_heads == 0")
    out_dim = num_heads * per_dim
    # columns ordered [head0 p0..p-1, head1 p0..p-1, ...] == torch.cat(out, 1)
    w_packed = jnp.transpose(w_stacked, (1, 0, 2)).reshape(input_dim, out_dim)
    # q_exp[i, j] = q[head(i), p(i)] if head(i) == head(j) else 0
    head_of = jnp.arange(out_dim) // per_dim
    same_head = (head_of[:, None] == head_of[None, :]).astype(w_stacked.dtype)
    q_exp = q_stacked.reshape(out_dim)[:, None] * same_head
    # fold the query into the projection: x @ w_packed @ q_exp == x @ wq_packed
    wq_packed = (w_packed.astype(jnp.float32) @ q_exp.astype(jnp.float32)
                 ).astype(w_packed.dtype)
    return w_packed, wq_packed


def attention_module_forward(x_flat, w_packed, wq_packed, *, split,
                             tile_n=4096):
    """x_flat: (N, split*input_dim); w_packed/wq_packed: (input_dim, out_dim)."""
    n, sd = x_flat.shape
    input_dim = sd // split
    assert sd == split * input_dim
    assert w_packed.shape[0] == input_dim and wq_packed.shape == w_packed.shape
    out_dim = w_packed.shape[1]

    # --- tile selection: big row tiles (kernel is HBM / grid-step bound),
    #     multiple of 8 sublanes, capped by the (padded) batch, and keep
    #     >= 2 grid steps when possible so both v7x TensorCores get work.
    n_ceil8 = _round_up(n, 8)
    tile_n = max(8, min(_round_up(int(tile_n), 8), n_ceil8))
    if n_ceil8 > 8 and (n_ceil8 + tile_n - 1) // tile_n < 2:
        tile_n = max(8, _round_up((n + 1) // 2, 8))
    n_pad = _round_up(n, tile_n)
    x_in = x_flat if n_pad == n else jnp.pad(x_flat, ((0, n_pad - n), (0, 0)))

    kernel = functools.partial(_attention_kernel, split=split,
                               input_dim=input_dim)
    out = pl.pallas_call(
        kernel,
        out_shape=jax.ShapeDtypeStruct((n_pad, out_dim), x_flat.dtype),
        grid_spec=pltpu.PrefetchScalarGridSpec(
            num_scalar_prefetch=0,
            grid=(n_pad // tile_n,),
            in_specs=[
                pl.BlockSpec((tile_n, sd), lambda i: (i, 0)),
                pl.BlockSpec((input_dim, out_dim), lambda i: (0, 0)),
                pl.BlockSpec((input_dim, out_dim), lambda i: (0, 0)),
            ],
            out_specs=pl.BlockSpec((tile_n, out_dim), lambda i: (i, 0)),
        ),
        compiler_params=pltpu.CompilerParams(
            dimension_semantics=("parallel",)),
    )(x_in, w_packed, wq_packed)
    return out[:n] if n_pad != n else out


def _reference(x_flat, w_stacked, q_stacked, split):
    num_heads, input_dim, per_dim = w_stacked.shape
    n = x_flat.shape[0]
    x = jnp.reshape(x_flat, (n, split, input_dim))
    outs = []
    for h in range(num_heads):
        x_h = jnp.einsum("nsd,dp->nsp", x, w_stacked[h])
        att = jnp.einsum("nsp,p->ns", x_h, q_stacked[h])
        att = jnp.where(att > 0, att, 0.2 * att)
        att = jax.nn.softmax(att, axis=1)
        outs.append(jnp.sum(x_h * att[:, :, None], axis=1))
    return jnp.concatenate(outs, axis=1)


def _glorot_uniform(key, shape, gain=1.0):
    fan_in, fan_out = shape[0], shape[1]
    limit = gain * jnp.sqrt(6.0 / (fan_in + fan_out))
    return jax.random.uniform(key, shape, jnp.float32, -limit, limit)


if __name__ == "__main__":
    # small shapes consistent with the module
    N = 16
    INPUT_DIM = 32
    NUM_HEADS = 4
    SPLIT = 2
    PER_DIM = INPUT_DIM // NUM_HEADS

    root = jax.random.PRNGKey(0)
    kx, *kws = jax.random.split(root, 1 + 2 * NUM_HEADS)

    # deterministic parameter init (glorot for W, xavier_uniform gain=1.414 for q)
    w_stacked = jnp.stack(
        [_glorot_uniform(kws[h], (INPUT_DIM, PER_DIM)) for h in range(NUM_HEADS)]
    )  # (H, D, P)
    q_stacked = jnp.stack(
        [_glorot_uniform(kws[NUM_HEADS + h], (PER_DIM, 1), gain=1.414)[:, 0]
         for h in range(NUM_HEADS)]
    )  # (H, P)

    x_flat = jax.random.normal(kx, (N, SPLIT * INPUT_DIM), jnp.float32)

    w_packed, wq_packed = pack_params(w_stacked, q_stacked)
    out = attention_module_forward(x_flat, w_packed, wq_packed, split=SPLIT)
    out = jax.block_until_ready(out)

    ref = _reference(x_flat, w_stacked, q_stacked, SPLIT)
    assert out.shape == (N, INPUT_DIM)
    assert jnp.allclose(out, ref, atol=1e-4, rtol=1e-4), "mismatch vs reference"

    print("KERNEL_OK")
</pallas_src>

<mosaic_0001>
module attributes {stable_mosaic.version = 11 : i64} {
  func.func @_attention_kernel(%arg0: i32, %arg1: memref<8x64xf32, #tpu.memory_space<vmem>>, %arg2: memref<32x32xf32, #tpu.memory_space<vmem>>, %arg3: memref<32x32xf32, #tpu.memory_space<vmem>>, %arg4: memref<8x32xf32, #tpu.memory_space<vmem>>) attributes {dimension_semantics = [#tpu.dimension_semantics<parallel>], iteration_bounds = array<i64: 2>, scalar_prefetch = 0 : i64, scratch_operands = 0 : i64, tpu.core_type = #tpu.core_type<tc>, window_params = [{transform_indices = @transform_0, window_bounds = array<i64: 8, 64>}, {pipeline_mode = #tpu.pipeline_mode<synchronous>, transform_indices = @transform_1, window_bounds = array<i64: 32, 32>}, {pipeline_mode = #tpu.pipeline_mode<synchronous>, transform_indices = @transform_2, window_bounds = array<i64: 32, 32>}, {transform_indices = @transform_3, window_bounds = array<i64: 8, 32>}]} {
    %c0 = arith.constant 0 : index
    %c0_0 = arith.constant 0 : index
    %0 = vector.load %arg2[%c0, %c0_0] : memref<32x32xf32, #tpu.memory_space<vmem>>, vector<32x32xf32>
    %c0_1 = arith.constant 0 : index
    %c0_2 = arith.constant 0 : index
    %1 = vector.load %arg3[%c0_1, %c0_2] : memref<32x32xf32, #tpu.memory_space<vmem>>, vector<32x32xf32>
    %c0_3 = arith.constant 0 : index
    %c0_4 = arith.constant 0 : index
    %2 = vector.load %arg1[%c0_3, %c0_4] : memref<8x64xf32, #tpu.memory_space<vmem>>, vector<8x32xf32>
    %cst = arith.constant dense<0.000000e+00> : vector<8x32xf32>
    %3 = tpu.matmul %2, %0, %cst {dimension_numbers = #tpu.dot_dimension_numbers<[1], [0], [0], [1], [0, 0, 1, 1], [], []>} : vector<8x32xf32>, vector<32x32xf32>, vector<8x32xf32> -> vector<8x32xf32>
    %cst_5 = arith.constant dense<0.000000e+00> : vector<8x32xf32>
    %4 = tpu.matmul %2, %1, %cst_5 {dimension_numbers = #tpu.dot_dimension_numbers<[1], [0], [0], [1], [0, 0, 1, 1], [], []>} : vector<8x32xf32>, vector<32x32xf32>, vector<8x32xf32> -> vector<8x32xf32>
    %cst_6 = arith.constant 0.000000e+00 : f32
    %5 = vector.broadcast %cst_6 : f32 to vector<8x32xf32>
    %6 = arith.cmpf ogt, %4, %5 : vector<8x32xf32>
    %cst_7 = arith.constant 2.000000e-01 : f32
    %7 = vector.broadcast %cst_7 : f32 to vector<8x32xf32>
    %8 = arith.mulf %7, %4 : vector<8x32xf32>
    %9 = arith.select %6, %4, %8 : vector<8x32xi1>, vector<8x32xf32>
    %c0_8 = arith.constant 0 : index
    %c32 = arith.constant 32 : index
    %10 = vector.load %arg1[%c0_8, %c32] : memref<8x64xf32, #tpu.memory_space<vmem>>, vector<8x32xf32>
    %cst_9 = arith.constant dense<0.000000e+00> : vector<8x32xf32>
    %11 = tpu.matmul %10, %0, %cst_9 {dimension_numbers = #tpu.dot_dimension_numbers<[1], [0], [0], [1], [0, 0, 1, 1], [], []>} : vector<8x32xf32>, vector<32x32xf32>, vector<8x32xf32> -> vector<8x32xf32>
    %cst_10 = arith.constant dense<0.000000e+00> : vector<8x32xf32>
    %12 = tpu.matmul %10, %1, %cst_10 {dimension_numbers = #tpu.dot_dimension_numbers<[1], [0], [0], [1], [0, 0, 1, 1], [], []>} : vector<8x32xf32>, vector<32x32xf32>, vector<8x32xf32> -> vector<8x32xf32>
    %cst_11 = arith.constant 0.000000e+00 : f32
    %13 = vector.broadcast %cst_11 : f32 to vector<8x32xf32>
    %14 = arith.cmpf ogt, %12, %13 : vector<8x32xf32>
    %cst_12 = arith.constant 2.000000e-01 : f32
    %15 = vector.broadcast %cst_12 : f32 to vector<8x32xf32>
    %16 = arith.mulf %15, %12 : vector<8x32xf32>
    %17 = arith.select %14, %12, %16 : vector<8x32xi1>, vector<8x32xf32>
    %18 = arith.maximumf %9, %17 : vector<8x32xf32>
    %19 = arith.subf %9, %18 : vector<8x32xf32>
    %20 = math.exp %19 : vector<8x32xf32>
    %21 = arith.subf %17, %18 : vector<8x32xf32>
    %22 = math.exp %21 : vector<8x32xf32>
    %23 = arith.addf %20, %22 : vector<8x32xf32>
    %cst_13 = arith.constant 1.000000e+00 : f32
    %24 = vector.broadcast %cst_13 : f32 to vector<8x32xf32>
    %25 = arith.divf %24, %23 : vector<8x32xf32>
    %26 = arith.mulf %20, %25 : vector<8x32xf32>
    %27 = arith.mulf %3, %26 : vector<8x32xf32>
    %28 = arith.mulf %22, %25 : vector<8x32xf32>
    %29 = arith.mulf %11, %28 : vector<8x32xf32>
    %30 = arith.addf %27, %29 : vector<8x32xf32>
    %c0_14 = arith.constant 0 : index
    %c0_15 = arith.constant 0 : index
    %31 = vector.load %arg4[%c0_14, %c0_15] : memref<8x32xf32, #tpu.memory_space<vmem>>, vector<8x32xf32>
    tpu.vector_store %arg4[%c0_14, %c0_15], %30 {strides = array<i32>} : memref<8x32xf32, #tpu.memory_space<vmem>>, vector<8x32xf32>,
    return
  }
  func.func @transform_0(%arg0: i32) -> (i32, i32) {
    %c0_i32 = arith.constant 0 : i32
    %c0_i32_0 = arith.constant 0 : i32
    return %arg0, %c0_i32 : i32, i32
  }
  func.func @transform_1(%arg0: i32) -> (i32, i32) {
    %c0_i32 = arith.constant 0 : i32
    %c0_i32_0 = arith.constant 0 : i32
    %c0_i32_1 = arith.constant 0 : i32
    return %c0_i32, %c0_i32_0 : i32, i32
  }
  func.func @transform_2(%arg0: i32) -> (i32, i32) {
    %c0_i32 = arith.constant 0 : i32
    %c0_i32_0 = arith.constant 0 : i32
    %c0_i32_1 = arith.constant 0 : i32
    return %c0_i32, %c0_i32_0 : i32, i32
  }
  func.func @transform_3(%arg0: i32) -> (i32, i32) {
    %c0_i32 = arith.constant 0 : i32
    %c0_i32_0 = arith.constant 0 : i32
    return %arg0, %c0_i32 : i32, i32
  }
}

</mosaic_0001>

<llo_original>
// kernel: tpu_custom_call.1
$region0: #{tpu_custom_call.1}
  #allocation0 [shape = 'u32[]', space=smem, size = 0x4, offset = 0x4, fixed_abs, tag = 'smem constant byte address 0x4 - core index']
  #allocation1 [shape = 'u32[144,128]{1,0:T(1,128)}', space=vmem, size = 0x12000, scoped, tag = 'internal scratch']
  %s0 = inlined_call_operand.hbm [shape: f32[16,64], index: 0, kind: input, shape index: {}]
  %s1 = inlined_call_operand.hbm [shape: f32[32,32], index: 1, kind: input, shape index: {}]
  %s2 = inlined_call_operand.hbm [shape: f32[32,32], index: 2, kind: input, shape index: {}]
  %s3 = inlined_call_operand.hbm [shape: f32[16,32], index: 3, kind: output, shape index: {}]
  %s4 = sld [smem:[#allocation0]]
  $region57: #{tpu_custom_call.1} parent=0
    _
  %s6 = ssub.s32 1, %s4
  %s7 = scalar_select 0, %s6, %s4
  $region1: #{tpu_custom_call.1} parent=0
    #allocation2 [shape = 'u8[8192]{0}', space=vmem, size = 0x2000, scoped, tag = 'input window, operand 0']
    #allocation3 [shape = 's32[2]{0}', space=sflag, size = 0x8, scoped, tag = 'scoped memory for tpu_custom_call.1']
    #allocation4 [shape = 's32[2]{0}', space=sflag, size = 0x8, scoped, tag = 'scoped memory for tpu_custom_call.1']
    #allocation5 [shape = 'u8[16384]{0}', space=vmem, size = 0x4000, scoped, tag = 'input window, operand 1, single buffered']
    #allocation6 [shape = 's32[1]{0}', space=sflag, size = 0x4, scoped, tag = 'scoped memory for tpu_custom_call.1']
    #allocation7 [shape = 'u8[16384]{0}', space=vmem, size = 0x4000, scoped, tag = 'input window, operand 2, single buffered']
    #allocation8 [shape = 'u8[8192]{0}', space=vmem, size = 0x2000, scoped, tag = 'output window, operand 0']
    %8 = vsyncpa [#allocation3], 0
    %s9 = scalar_lea.sflag [#allocation3], 1
    %10 = vsyncpa %s9, 0
    %11 = vsyncpa [#allocation6], 0
    %12 = vsyncpa [#allocation4], 0
    %s13 = scalar_lea.sflag [#allocation4], 1
    %14 = vsyncpa %s13, 0
    loop: start=0, step=1, limit=4
    $region2: #{tpu_custom_call.1} parent=1 // loop_pre_header
      _
    $region3: #{tpu_custom_call.1} parent=1 // loop_header
      %s16 = sphi 0, %s20
      %p17 = scmp.ge.s32.totalorder %s16, 4
      %s26 = sphi 0, %s28
      %s29 = sphi 0, %s26
      %s30 = sphi 0, %s29
      %s46 = sphi 0, %s30
      %s50 = sphi 0, %s50
      %s52 = sphi 0, %s50
      %s53 = sphi 0, %s52
      %s67 = sphi 0, %s53
      %s71 = sphi 0, %s71
      %s73 = sphi 0, %s71
      %s74 = sphi 0, %s73
      %s88 = sphi 0, %s74
      %s94 = sphi 0, %s96
      %s97 = sphi 0, %s94
      %s98 = sphi 0, %s97
      %s114 = sphi 0, %s98
    $region4: #{tpu_custom_call.1} parent=1 // loop_header_branch
      %19 = sbr.rel (%p17) target = $region8
    $region5: #{tpu_custom_call.1} parent=1 // loop_body
      %s21 = ssub.s32 %s16, 1
      %s22 = ssub.s32 %s16, 2
      %s23 = sadd.s32 %s16, 1
      %s24 = ssub.s32 %s16, %s23
      %p25 = scmp.eq.s32.totalorder %s24, 0
      %s27 = sadd.s32 %s26, 1
      %s28 = scalar_select %p25, %s26, %s27
      %p31 = pneg %p25
      %p32 = scmp.eq.s32.totalorder %s16, 1
      %p33 = por %p31, %p32
      %p34 = scmp.ne.s32.totalorder %s26, %s29
      %p35 = scmp.eq.s32.totalorder %s16, 0
      %p36 = por %p34, %p35
      %p37 = scmp.ne.s32.totalorder %s26, %s29
      %p38 = scmp.eq.s32.totalorder %s21, 1
      %p39 = por %p37, %p38
      %p40 = scmp.ne.s32.totalorder %s29, %s30
      %p41 = scmp.eq.s32.totalorder %s21, 0
      %p42 = por %p40, %p41
      %p43 = scmp.ne.s32.totalorder %s29, %s30
      %p44 = scmp.eq.s32.totalorder %s22, 1
      %p45 = por %p43, %p44
      %p47 = scmp.ne.s32.totalorder %s30, %s46
      %p48 = scmp.eq.s32.totalorder %s22, 0
      %p49 = por %p47, %p48
      %s51 = sadd.s32 %s50, 1
      %p54 = scmp.eq.s32.totalorder %s16, 1
      %p55 = scmp.ne.s32.totalorder %s50, %s52
      %p56 = scmp.eq.s32.totalorder %s16, 0
      %p57 = por %p55, %p56
      %p58 = scmp.ne.s32.totalorder %s50, %s52
      %p59 = scmp.eq.s32.totalorder %s21, 1
      %p60 = por %p58, %p59
      %p61 = scmp.ne.s32.totalorder %s52, %s53
      %p62 = scmp.eq.s32.totalorder %s21, 0
      %p63 = por %p61, %p62
      %p64 = scmp.ne.s32.totalorder %s52, %s53
      %p65 = scmp.eq.s32.totalorder %s22, 1
      %p66 = por %p64, %p65
      %p68 = scmp.ne.s32.totalorder %s53, %s67
      %p69 = scmp.eq.s32.totalorder %s22, 0
      %p70 = por %p68, %p69
      %s72 = sadd.s32 %s71, 1
      %p75 = scmp.eq.s32.totalorder %s16, 1
      %p76 = scmp.ne.s32.totalorder %s71, %s73
      %p77 = scmp.eq.s32.totalorder %s16, 0
      %p78 = por %p76, %p77
      %p79 = scmp.ne.s32.totalorder %s71, %s73
      %p80 = scmp.eq.s32.totalorder %s21, 1
      %p81 = por %p79, %p80
      %p82 = scmp.ne.s32.totalorder %s73, %s74
      %p83 = scmp.eq.s32.totalorder %s21, 0
      %p84 = por %p82, %p83
      %p85 = scmp.ne.s32.totalorder %s73, %s74
      %p86 = scmp.eq.s32.totalorder %s22, 1
      %p87 = por %p85, %p86
      %p89 = scmp.ne.s32.totalorder %s74, %s88
      %p90 = scmp.eq.s32.totalorder %s22, 0
      %p91 = por %p89, %p90
      %s92 = ssub.s32 %s16, %s23
      %p93 = scmp.eq.s32.totalorder %s92, 0
      %s95 = sadd.s32 %s94, 1
      %s96 = scalar_select %p93, %s94, %s95
      %p99 = pneg %p93
      %p100 = scmp.eq.s32.totalorder %s16, 1
      %p101 = por %p99, %p100
      %p102 = scmp.ne.s32.totalorder %s94, %s97
      %p103 = scmp.eq.s32.totalorder %s16, 0
      %p104 = por %p102, %p103
      %p105 = scmp.ne.s32.totalorder %s94, %s97
      %p106 = scmp.eq.s32.totalorder %s21, 1
      %p107 = por %p105, %p106
      %p108 = scmp.ne.s32.totalorder %s97, %s98
      %p109 = scmp.eq.s32.totalorder %s21, 0
      %p110 = por %p108, %p109
      %p111 = scmp.ne.s32.totalorder %s97, %s98
      %p112 = scmp.eq.s32.totalorder %s22, 1
      %p113 = por %p111, %p112
      %p115 = scmp.ne.s32.totalorder %s98, %s114
      %p116 = scmp.eq.s32.totalorder %s22, 0
      %p117 = por %p115, %p116
      %p118 = scmp.le.s32.totalorder 1, %s16
      %p119 = scmp.lt.s32.totalorder %s16, 3
      %p120 = pnand %p118, %p119
      %p121 = pneg %p120
      // Predicated region
      $region9: #{tpu_custom_call.1} parent=5 // pred_check
        _
      $region10: #{tpu_custom_call.1} parent=5 // pred_check_branch
        %123 = sbr.rel (%p120) target = $region12
      $region11: #{tpu_custom_call.1} parent=5 // pred_region
        %s124 = ssub.s32 %s16, 1
        // Predicated region
        $region13: #{tpu_custom_call.1} parent=11 // pred_check
          %p125 = pneg %p63
        $region14: #{tpu_custom_call.1} parent=11 // pred_check_branch
          %127 = sbr.rel (%p125) target = $region16
        $region15: #{tpu_custom_call.1} parent=11 // pred_region
          %s129 = ssub.s32 512, 512
          %130 = vsyncadd [#allocation6], %s129
          %s131 = sshll.u32 [#allocation5], 4
          %s132 = int_to_ptr.vmem [resolvable:$true] %s131
          %137 = dma.hbm_to_vmem [thread:$0]  %s1, 512, %s132, [#allocation6], 128, 128, 8
        $region16: #{tpu_custom_call.1} parent=11 // pred_fallthru
          _
        // Predicated region
        $region17: #{tpu_custom_call.1} parent=11 // pred_check
          %p138 = pneg %p84
        $region18: #{tpu_custom_call.1} parent=11 // pred_check_branch
          %140 = sbr.rel (%p138) target = $region20
        $region19: #{tpu_custom_call.1} parent=11 // pred_region
          %s142 = ssub.s32 512, 512
          %143 = vsyncadd [#allocation6], %s142
          %s144 = sshll.u32 [#allocation7], 4
          %s145 = int_to_ptr.vmem [resolvable:$true] %s144
          %150 = dma.hbm_to_vmem [thread:$0]  %s2, 512, %s145, [#allocation6], 128, 128, 8
        $region20: #{tpu_custom_call.1} parent=11 // pred_fallthru
          _
      $region12: #{tpu_custom_call.1} parent=5 // pred_fallthru
        _
      %p151 = scmp.lt.s32.totalorder %s16, 2
      // Predicated region
      $region21: #{tpu_custom_call.1} parent=5 // pred_check
        %p152 = pneg %p151
      $region22: #{tpu_custom_call.1} parent=5 // pred_check_branch
        %154 = sbr.rel (%p152) target = $region24
      $region23: #{tpu_custom_call.1} parent=5 // pred_region
        // Predicated region
        $region25: #{tpu_custom_call.1} parent=23 // pred_check
          %p155 = pneg %p36
        $region26: #{tpu_custom_call.1} parent=23 // pred_check_branch
          %157 = sbr.rel (%p155) target = $region28
        $region27: #{tpu_custom_call.1} parent=23 // pred_region
          %s158 = sand.u32 %s26, 1
          %s159 = scalar_lea.sflag [#allocation3], %s158
          %s160 = sand.u32 %s26, 1
          %s161 = smul.addr %s160, 8
          %s162 = scalar_lea.vmem [#allocation2], %s161
          %s164 = ssub.s32 128, 128
          %165 = vsyncadd %s159, %s164
          %s166 = smul.addr %s16, 128
          %s167 = scalar_lea.hbm %s0, %s166
          %s169 = sshll.u32 %s162, 4
          %s170 = int_to_ptr.vmem [resolvable:$true] %s169
          %172 = dma.hbm_to_vmem [thread:$0]  %s167, 128, %s170, %s159
        $region28: #{tpu_custom_call.1} parent=23 // pred_fallthru
          _
      $region24: #{tpu_custom_call.1} parent=5 // pred_fallthru
        _
      %p173 = scmp.le.s32.totalorder 1, %s16
      %p174 = scmp.lt.s32.totalorder %s16, 3
      %p175 = pnand %p173, %p174
      %p176 = pneg %p175
      // Predicated region
      $region29: #{tpu_custom_call.1} parent=5 // pred_check
        _
      $region30: #{tpu_custom_call.1} parent=5 // pred_check_branch
        %178 = sbr.rel (%p175) target = $region32
      $region31: #{tpu_custom_call.1} parent=5 // pred_region
        %s179 = ssub.s32 %s16, 1
        %s180 = sand.u32 %s29, 1
        %s181 = scalar_lea.sflag [#allocation3], %s180
        %s182 = sand.u32 %s29, 1
        %s183 = smul.addr %s182, 8
        %s184 = scalar_lea.vmem [#allocation2], %s183
        // Predicated region
        $region33: #{tpu_custom_call.1} parent=31 // pred_check
          %p185 = pneg %p42
        $region34: #{tpu_custom_call.1} parent=31 // pred_check_branch
          %187 = sbr.rel (%p185) target = $region36
        $region35: #{tpu_custom_call.1} parent=31 // pred_region
          %188 = dma.done %s181, 128
        $region36: #{tpu_custom_call.1} parent=31 // pred_fallthru
          _
        // Predicated region
        $region37: #{tpu_custom_call.1} parent=31 // pred_check
          %p189 = pneg %p63
        $region38: #{tpu_custom_call.1} parent=31 // pred_check_branch
          %191 = sbr.rel (%p189) target = $region40
        $region39: #{tpu_custom_call.1} parent=31 // pred_region
          %192 = dma.done [#allocation6], 512
        $region40: #{tpu_custom_call.1} parent=31 // pred_fallthru
          _
        // Predicated region
        $region41: #{tpu_custom_call.1} parent=31 // pred_check
          %p193 = pneg %p84
        $region42: #{tpu_custom_call.1} parent=31 // pred_check_branch
          %195 = sbr.rel (%p193) target = $region44
        $region43: #{tpu_custom_call.1} parent=31 // pred_region
          %196 = dma.done [#allocation6], 512
        $region44: #{tpu_custom_call.1} parent=31 // pred_fallthru
          _
        %s197 = sand.u32 %s29, 1
        %s198 = scalar_lea.sflag [#allocation3], %s197
        %s199 = sand.u32 %s29, 1
        %s200 = smul.addr %s199, 8
        %s201 = scalar_lea.vmem [#allocation2], %s200
        %p202 = pneg %p42
        %p203 = pneg %p39
        %p204 = pneg %p63
        %p205 = pneg %p60
        %p206 = pneg %p84
        %p207 = pneg %p81
        %p208 = pneg %p110
        %p209 = pneg %p107
        %s210 = sand.u32 %s97, 1
        %s211 = scalar_lea.sflag [#allocation4], %s210
        %s212 = sand.u32 %s97, 1
        %s213 = smul.addr %s212, 8
        %s214 = scalar_lea.vmem [#allocation8], %s213
        %v215 = vld [vmem:[#allocation5] sm:$0xff]
        %v216 = vld [vmem:[#allocation5 + $0x8] sm:$0xff]
        %v217 = vld [vmem:[#allocation5 + $0x10] sm:$0xff]
        %v218 = vld [vmem:[#allocation5 + $0x18] sm:$0xff]
        %v219 = vld [vmem:[#allocation7] sm:$0xff]
        %v220 = vld [vmem:[#allocation7 + $0x8] sm:$0xff]
        %v221 = vld [vmem:[#allocation7 + $0x10] sm:$0xff]
        %v222 = vld [vmem:[#allocation7 + $0x18] sm:$0xff]
        %v223 = vld [vmem:[%s184] sm:$0xff]
        %vm224 = vcmask 261120
        %v226 = vsel %vm224, %v223, 0
        %228 = vmatprep.subr.mxu0 0.0
        %229 = vmatpush1.msra.mxu0 %v215
        %230 = vmatprep.subr.mxu0 0.0
        %231 = vmatpush1.msra.mxu0 %v216
        %232 = vmatprep.subr.mxu0 0.0
        %233 = vmatpush1.msra.mxu0 %v217
        %234 = vmatprep.subr.mxu0 0.0
        %235 = vmatpush1.msra.mxu0 %v218
        %236 = vmatprep.subr.mxu0 0.0
        %237 = vmatpush1.msra.mxu0 0.0
        %238 = vmatprep.subr.mxu0 0.0
        %239 = vmatpush1.msra.mxu0 0.0
        %240 = vmatprep.subr.mxu0 0.0
        %241 = vmatpush1.msra.mxu0 0.0
        %242 = vmatprep.subr.mxu0 0.0
        %243 = vmatpush1.msra.mxu0 0.0
        %244 = vmatprep.subr.mxu0 0.0
        %245 = vmatpush1.msra.mxu0 0.0
        %246 = vmatprep.subr.mxu0 0.0
        %247 = vmatpush1.msra.mxu0 0.0
        %248 = vmatprep.subr.mxu0 0.0
        %249 = vmatpush1.msra.mxu0 0.0
        %250 = vmatprep.subr.mxu0 0.0
        %251 = vmatpush1.msra.mxu0 0.0
        %252 = vmatprep.subr.mxu0 0.0
        %253 = vmatpush1.msra.mxu0 0.0
        %254 = vmatprep.subr.mxu0 0.0
        %255 = vmatpush1.msra.mxu0 0.0
        %256 = vmatprep.subr.mxu0 0.0
        %257 = vmatpush1.msra.mxu0 0.0
        %258 = vmatprep.subr.mxu0 0.0
        %259 = vmatpush1.msra.mxu0 0.0
        %260 = vmatprep.subr.mxu0 0.0
        %261 = vmatpush1.msra.mxu0 0.0
        %262 = vmatprep.subr.mxu0 0.0
        %263 = vmatpush1.msra.mxu0 0.0
        %264 = vmatprep.subr.mxu0 0.0
        %265 = vmatpush1.msra.mxu0 0.0
        %266 = vmatprep.subr.mxu0 0.0
        %267 = vmatpush1.msra.mxu0 0.0
        %268 = vmatprep.subr.mxu0 0.0
        %269 = vmatpush1.msra.mxu0 0.0
        %270 = vmatprep.subr.mxu0 0.0
        %271 = vmatpush1.msra.mxu0 0.0
        %272 = vmatprep.subr.mxu0 0.0
        %273 = vmatpush1.msra.mxu0 0.0
        %274 = vmatprep.subr.mxu0 0.0
        %275 = vmatpush1.msra.mxu0 0.0
        %276 = vmatprep.subr.mxu0 0.0
        %277 = vmatpush1.msra.mxu0 0.0
        %278 = vmatprep.subr.mxu0 0.0
        %279 = vmatpush1.msra.mxu0 0.0
        %280 = vmatprep.subr.mxu0 0.0
        %281 = vmatpush1.msra.mxu0 0.0
        %282 = vmatprep.subr.mxu0 0.0
        %283 = vmatpush1.msra.mxu0 0.0
        %284 = vmatprep.subr.mxu0 0.0
        %285 = vmatpush1.msra.mxu0 0.0
        %286 = vmatprep.subr.mxu0 0.0
        %287 = vmatpush1.msra.mxu0 0.0
        %288 = vmatprep.subr.mxu0 0.0
        %289 = vmatpush1.msra.mxu0 0.0
        %290 = vmatprep.subr.mxu0 0.0
        %291 = vmatpush1.msra.mxu0 0.0
        %292 = vmatprep.mubr.f32.mxu0 0.0
        %293 = vmatmul.mubr.f32.gmra.mrb[0].mxu0 %v226
        %v294 = vpop.f32.mrb[0].mxu0
        %v295 = vadd.f32 0.0, %v294
        %v296 = vpop.f32.mrb[0].mxu0
        %297 = vdwg.mxu0
        %298 = vmatprep.subr.mxu0 0.0
        %299 = vmatpush1.msra.mxu0 %v219
        %300 = vmatprep.subr.mxu0 0.0
        %301 = vmatpush1.msra.mxu0 %v220
        %302 = vmatprep.subr.mxu0 0.0
        %303 = vmatpush1.msra.mxu0 %v221
        %304 = vmatprep.subr.mxu0 0.0
        %305 = vmatpush1.msra.mxu0 %v222
        %306 = vmatprep.subr.mxu0 0.0
        %307 = vmatpush1.msra.mxu0 0.0
        %308 = vmatprep.subr.mxu0 0.0
        %309 = vmatpush1.msra.mxu0 0.0
        %310 = vmatprep.subr.mxu0 0.0
        %311 = vmatpush1.msra.mxu0 0.0
        %312 = vmatprep.subr.mxu0 0.0
        %313 = vmatpush1.msra.mxu0 0.0
        %314 = vmatprep.subr.mxu0 0.0
        %315 = vmatpush1.msra.mxu0 0.0
        %316 = vmatprep.subr.mxu0 0.0
        %317 = vmatpush1.msra.mxu0 0.0
        %318 = vmatprep.subr.mxu0 0.0
        %319 = vmatpush1.msra.mxu0 0.0
        %320 = vmatprep.subr.mxu0 0.0
        %321 = vmatpush1.msra.mxu0 0.0
        %322 = vmatprep.subr.mxu0 0.0
        %323 = vmatpush1.msra.mxu0 0.0
        %324 = vmatprep.subr.mxu0 0.0
        %325 = vmatpush1.msra.mxu0 0.0
        %326 = vmatprep.subr.mxu0 0.0
        %327 = vmatpush1.msra.mxu0 0.0
        %328 = vmatprep.subr.mxu0 0.0
        %329 = vmatpush1.msra.mxu0 0.0
        %330 = vmatprep.subr.mxu0 0.0
        %331 = vmatpush1.msra.mxu0 0.0
        %332 = vmatprep.subr.mxu0 0.0
        %333 = vmatpush1.msra.mxu0 0.0
        %334 = vmatprep.subr.mxu0 0.0
        %335 = vmatpush1.msra.mxu0 0.0
        %336 = vmatprep.subr.mxu0 0.0
        %337 = vmatpush1.msra.mxu0 0.0
        %338 = vmatprep.subr.mxu0 0.0
        %339 = vmatpush1.msra.mxu0 0.0
        %340 = vmatprep.subr.mxu0 0.0
        %341 = vmatpush1.msra.mxu0 0.0
        %342 = vmatprep.subr.mxu0 0.0
        %343 = vmatpush1.msra.mxu0 0.0
        %344 = vmatprep.subr.mxu0 0.0
        %345 = vmatpush1.msra.mxu0 0.0
        %346 = vmatprep.subr.mxu0 0.0
        %347 = vmatpush1.msra.mxu0 0.0
        %348 = vmatprep.subr.mxu0 0.0
        %349 = vmatpush1.msra.mxu0 0.0
        %350 = vmatprep.subr.mxu0 0.0
        %351 = vmatpush1.msra.mxu0 0.0
        %352 = vmatprep.subr.mxu0 0.0
        %353 = vmatpush1.msra.mxu0 0.0
        %354 = vmatprep.subr.mxu0 0.0
        %355 = vmatpush1.msra.mxu0 0.0
        %356 = vmatprep.subr.mxu0 0.0
        %357 = vmatpush1.msra.mxu0 0.0
        %358 = vmatprep.subr.mxu0 0.0
        %359 = vmatpush1.msra.mxu0 0.0
        %360 = vmatprep.subr.mxu0 0.0
        %361 = vmatpush1.msra.mxu0 0.0
        %362 = vmatprep.mubr.f32.mxu0 0.0
        %363 = vmatmul.mubr.f32.gmra.mrb[0].mxu0 %v226
        %v364 = vpop.f32.mrb[0].mxu0
        %v365 = vadd.f32 0.0, %v364
        %v366 = vpop.f32.mrb[0].mxu0
        %367 = vdwg.mxu0
        %vm368 = vcmp.gt.f32.partialorder %v365, 0.0
        %v369 = vmul.f32 %v365, 0.2
        %v370 = vsel %vm368, %v365, %v369
        %371 = vrot.lane.b32.xlu0 %v223, 96
        %v372 = vpop.permute.xlu0 %371
        %v373 = vsel %vm224, %v372, 0
        %375 = vmatprep.subr.mxu0 0.0
        %376 = vmatpush1.msra.mxu0 %v215
        %377 = vmatprep.subr.mxu0 0.0
        %378 = vmatpush1.msra.mxu0 %v216
        %379 = vmatprep.subr.mxu0 0.0
        %380 = vmatpush1.msra.mxu0 %v217
        %381 = vmatprep.subr.mxu0 0.0
        %382 = vmatpush1.msra.mxu0 %v218
        %383 = vmatprep.subr.mxu0 0.0
        %384 = vmatpush1.msra.mxu0 0.0
        %385 = vmatprep.subr.mxu0 0.0
        %386 = vmatpush1.msra.mxu0 0.0
        %387 = vmatprep.subr.mxu0 0.0
        %388 = vmatpush1.msra.mxu0 0.0
        %389 = vmatprep.subr.mxu0 0.0
        %390 = vmatpush1.msra.mxu0 0.0
        %391 = vmatprep.subr.mxu0 0.0
        %392 = vmatpush1.msra.mxu0 0.0
        %393 = vmatprep.subr.mxu0 0.0
        %394 = vmatpush1.msra.mxu0 0.0
        %395 = vmatprep.subr.mxu0 0.0
        %396 = vmatpush1.msra.mxu0 0.0
        %397 = vmatprep.subr.mxu0 0.0
        %398 = vmatpush1.msra.mxu0 0.0
        %399 = vmatprep.subr.mxu0 0.0
        %400 = vmatpush1.msra.mxu0 0.0
        %401 = vmatprep.subr.mxu0 0.0
        %402 = vmatpush1.msra.mxu0 0.0
        %403 = vmatprep.subr.mxu0 0.0
        %404 = vmatpush1.msra.mxu0 0.0
        %405 = vmatprep.subr.mxu0 0.0
        %406 = vmatpush1.msra.mxu0 0.0
        %407 = vmatprep.subr.mxu0 0.0
        %408 = vmatpush1.msra.mxu0 0.0
        %409 = vmatprep.subr.mxu0 0.0
        %410 = vmatpush1.msra.mxu0 0.0
        %411 = vmatprep.subr.mxu0 0.0
        %412 = vmatpush1.msra.mxu0 0.0
        %413 = vmatprep.subr.mxu0 0.0
        %414 = vmatpush1.msra.mxu0 0.0
        %415 = vmatprep.subr.mxu0 0.0
        %416 = vmatpush1.msra.mxu0 0.0
        %417 = vmatprep.subr.mxu0 0.0
        %418 = vmatpush1.msra.mxu0 0.0
        %419 = vmatprep.subr.mxu0 0.0
        %420 = vmatpush1.msra.mxu0 0.0
        %421 = vmatprep.subr.mxu0 0.0
        %422 = vmatpush1.msra.mxu0 0.0
        %423 = vmatprep.subr.mxu0 0.0
        %424 = vmatpush1.msra.mxu0 0.0
        %425 = vmatprep.subr.mxu0 0.0
        %426 = vmatpush1.msra.mxu0 0.0
        %427 = vmatprep.subr.mxu0 0.0
        %428 = vmatpush1.msra.mxu0 0.0
        %429 = vmatprep.subr.mxu0 0.0
        %430 = vmatpush1.msra.mxu0 0.0
        %431 = vmatprep.subr.mxu0 0.0
        %432 = vmatpush1.msra.mxu0 0.0
        %433 = vmatprep.subr.mxu0 0.0
        %434 = vmatpush1.msra.mxu0 0.0
        %435 = vmatprep.subr.mxu0 0.0
        %436 = vmatpush1.msra.mxu0 0.0
        %437 = vmatprep.subr.mxu0 0.0
        %438 = vmatpush1.msra.mxu0 0.0
        %439 = vmatprep.mubr.f32.mxu0 0.0
        %440 = vmatmul.mubr.f32.gmra.mrb[0].mxu0 %v373
        %v441 = vpop.f32.mrb[0].mxu0
        %v442 = vadd.f32 0.0, %v441
        %v443 = vpop.f32.mrb[0].mxu0
        %444 = vdwg.mxu0
        %445 = vmatprep.subr.mxu0 0.0
        %446 = vmatpush1.msra.mxu0 %v219
        %447 = vmatprep.subr.mxu0 0.0
        %448 = vmatpush1.msra.mxu0 %v220
        %449 = vmatprep.subr.mxu0 0.0
        %450 = vmatpush1.msra.mxu0 %v221
        %451 = vmatprep.subr.mxu0 0.0
        %452 = vmatpush1.msra.mxu0 %v222
        %453 = vmatprep.subr.mxu0 0.0
        %454 = vmatpush1.msra.mxu0 0.0
        %455 = vmatprep.subr.mxu0 0.0
        %456 = vmatpush1.msra.mxu0 0.0
        %457 = vmatprep.subr.mxu0 0.0
        %458 = vmatpush1.msra.mxu0 0.0
        %459 = vmatprep.subr.mxu0 0.0
        %460 = vmatpush1.msra.mxu0 0.0
        %461 = vmatprep.subr.mxu0 0.0
        %462 = vmatpush1.msra.mxu0 0.0
        %463 = vmatprep.subr.mxu0 0.0
        %464 = vmatpush1.msra.mxu0 0.0
        %465 = vmatprep.subr.mxu0 0.0
        %466 = vmatpush1.msra.mxu0 0.0
        %467 = vmatprep.subr.mxu0 0.0
        %468 = vmatpush1.msra.mxu0 0.0
        %469 = vmatprep.subr.mxu0 0.0
        %470 = vmatpush1.msra.mxu0 0.0
        %471 = vmatprep.subr.mxu0 0.0
        %472 = vmatpush1.msra.mxu0 0.0
        %473 = vmatprep.subr.mxu0 0.0
        %474 = vmatpush1.msra.mxu0 0.0
        %475 = vmatprep.subr.mxu0 0.0
        %476 = vmatpush1.msra.mxu0 0.0
        %477 = vmatprep.subr.mxu0 0.0
        %478 = vmatpush1.msra.mxu0 0.0
        %479 = vmatprep.subr.mxu0 0.0
        %480 = vmatpush1.msra.mxu0 0.0
        %481 = vmatprep.subr.mxu0 0.0
        %482 = vmatpush1.msra.mxu0 0.0
        %483 = vmatprep.subr.mxu0 0.0
        %484 = vmatpush1.msra.mxu0 0.0
        %485 = vmatprep.subr.mxu0 0.0
        %486 = vmatpush1.msra.mxu0 0.0
        %487 = vmatprep.subr.mxu0 0.0
        %488 = vmatpush1.msra.mxu0 0.0
        %489 = vmatprep.subr.mxu0 0.0
        %490 = vmatpush1.msra.mxu0 0.0
        %491 = vmatprep.subr.mxu0 0.0
        %492 = vmatpush1.msra.mxu0 0.0
        %493 = vmatprep.subr.mxu0 0.0
        %494 = vmatpush1.msra.mxu0 0.0
        %495 = vmatprep.subr.mxu0 0.0
        %496 = vmatpush1.msra.mxu0 0.0
        %497 = vmatprep.subr.mxu0 0.0
        %498 = vmatpush1.msra.mxu0 0.0
        %499 = vmatprep.subr.mxu0 0.0
        %500 = vmatpush1.msra.mxu0 0.0
        %501 = vmatprep.subr.mxu0 0.0
        %502 = vmatpush1.msra.mxu0 0.0
        %503 = vmatprep.subr.mxu0 0.0
        %504 = vmatpush1.msra.mxu0 0.0
        %505 = vmatprep.subr.mxu0 0.0
        %506 = vmatpush1.msra.mxu0 0.0
        %507 = vmatprep.subr.mxu0 0.0
        %508 = vmatpush1.msra.mxu0 0.0
        %509 = vmatprep.mubr.f32.mxu0 0.0
        %510 = vmatmul.mubr.f32.gmra.mrb[0].mxu0 %v373
        %v511 = vpop.f32.mrb[0].mxu0
        %v512 = vadd.f32 0.0, %v511
        %v513 = vpop.f32.mrb[0].mxu0
        %514 = vdwg.mxu0
        %vm515 = vcmp.gt.f32.partialorder %v512, 0.0
        %v516 = vmul.f32 %v512, 0.2
        %v517 = vsel %vm515, %v512, %v516
        %v518 = vmax.f32 %v370, %v517
        %v519 = vsub.f32 %v370, %v518
        %v520 = vmul.f32 %v519, 1.442695
        %v521 = vpow.pop %v520
        %v522 = vsub.f32 %v517, %v518
        %v523 = vmul.f32 %v522, 1.442695
        %v524 = vpow.pop %v523
        %v525 = vadd.f32 %v521, %v524
        %v526 = vrcp.pop %v525
        %v527 = vmul.f32 1.0, %v526
        %v528 = vmul.f32 %v521, %v527
        %v529 = vmul.f32 %v295, %v528
        %v530 = vmul.f32 %v524, %v527
        %v531 = vmul.f32 %v442, %v530
        %v532 = vadd.f32 %v529, %v531
        %533 = vst.msk [vmem:[%s214] sm:$0xff] %vm224, %v532
        %s534 = sand.u32 %s97, 1
        %s535 = scalar_lea.sflag [#allocation4], %s534
        %s536 = sand.u32 %s97, 1
        %s537 = smul.addr %s536, 8
        %s538 = scalar_lea.vmem [#allocation8], %s537
        // Predicated region
        $region45: #{tpu_custom_call.1} parent=31 // pred_check
          %p539 = pneg %p107
        $region46: #{tpu_custom_call.1} parent=31 // pred_check_branch
          %541 = sbr.rel (%p539) target = $region48
        $region47: #{tpu_custom_call.1} parent=31 // pred_region
          %s543 = ssub.s32 128, 128
          %544 = vsyncadd %s535, %s543
          %s545 = smul.addr %s21, 128
          %s546 = scalar_lea.hbm %s3, %s545
          %s548 = sshll.u32 %s538, 4
          %s549 = int_to_ptr.vmem [resolvable:$true] %s548
          %551 = dma.vmem_to_hbm [thread:$0]  %s549, 128, %s546, %s535
        $region48: #{tpu_custom_call.1} parent=31 // pred_fallthru
          _
      $region32: #{tpu_custom_call.1} parent=5 // pred_fallthru
        _
      %p552 = scmp.le.s32.totalorder 2, %s16
      // Predicated region
      $region49: #{tpu_custom_call.1} parent=5 // pred_check
        %p553 = pneg %p552
      $region50: #{tpu_custom_call.1} parent=5 // pred_check_branch
        %555 = sbr.rel (%p553) target = $region52
      $region51: #{tpu_custom_call.1} parent=5 // pred_region
        %s556 = ssub.s32 %s16, 2
        // Predicated region
        $region53: #{tpu_custom_call.1} parent=51 // pred_check
          %p557 = pneg %p113
        $region54: #{tpu_custom_call.1} parent=51 // pred_check_branch
          %559 = sbr.rel (%p557) target = $region56
        $region55: #{tpu_custom_call.1} parent=51 // pred_region
          %s560 = sand.u32 %s98, 1
          %s561 = scalar_lea.sflag [#allocation4], %s560
          %s562 = sand.u32 %s98, 1
          %s563 = smul.addr %s562, 8
          %s564 = scalar_lea.vmem [#allocation8], %s563
          %565 = dma.done %s561, 128
        $region56: #{tpu_custom_call.1} parent=51 // pred_fallthru
          _
      $region52: #{tpu_custom_call.1} parent=5 // pred_fallthru
        _
    $region6: #{tpu_custom_call.1} parent=1 // loop_footer
      %s20 = sadd.s32 1, %s16
    $region7: #{tpu_custom_call.1} parent=1 // loop_footer_branch
      %15 = sbr.rel target = $region3
    $region8: #{tpu_custom_call.1} parent=1 // loop_exit
      _
    %566 = vsyncpa [#allocation3], 1
    %s567 = scalar_lea.sflag [#allocation3], 1
    %568 = vsyncpa %s567, 1
    %569 = vsyncpa [#allocation6], 1
    %570 = vsyncpa [#allocation4], 1
    %s571 = scalar_lea.sflag [#allocation4], 1
    %572 = vsyncpa %s571, 1

</llo_original>
